<compile_context>
chip_gen: v5e
topology: v5e:2x2
jax: 0.10.0
libtpu: 0.0.40
codegen_flags: <defaults>
</compile_context>

<pallas_src>
import functools

import jax
import jax.numpy as jnp
from jax import lax
from jax.experimental import pallas as pl
from jax.experimental.pallas import tpu as pltpu

_MIB = 1024 * 1024


# ----------------------------------------------------------------------------
# Quantization range
# ----------------------------------------------------------------------------
def _qrange(bits: int, symmetric: bool):
    if bits == 8:
        return (-128.0, 127.0) if symmetric else (0.0, 255.0)
    if bits == 4:
        return (-8.0, 7.0) if symmetric else (0.0, 15.0)
    if bits == 16:
        return (-32768.0, 32767.0) if symmetric else (0.0, 65535.0)
    return (0.0, float(2 ** bits - 1))


def _round_up(x: int, m: int) -> int:
    return ((x + m - 1) // m) * m


# ----------------------------------------------------------------------------
# Generation-aware sizing
# ----------------------------------------------------------------------------
def _generation_params():
    """Returns (per-step VMEM budget, vmem_limit_bytes cap) for this TPU."""
    try:
        cap = int(pltpu.get_tpu_info().vmem_capacity_bytes)
    except Exception:
        cap = None
    if cap is None:
        return 32 * _MIB, 48 * _MIB            # unknown: safe on every gen
    if cap >= 100 * _MIB:                      # v5e / v6e: 128 MiB physical
        return 84 * _MIB, 100 * _MIB
    return 36 * _MIB, 52 * _MIB                # v7x: 64 MiB physical per TC


def _choose_row_tile(n_rows, h, itemsize, step_budget, n_streamed):
    """Rows per grid step.

    n_streamed tile-sized arrays are double-buffered in the input dtype, plus
    ~2 f32 working copies for the compute, and must fit the per-step budget.
    Sizing by the actual itemsize lets bf16/fp8 caches stream more rows per
    step at the same VMEM footprint.
    """
    per_row = h * (2 * n_streamed * itemsize + 2 * 4)
    rows = (step_budget // max(1, per_row)) // 8 * 8
    rows = max(8, rows)
    # Never exceed the (floor-aligned) row count -> only standard partial
    # boundary blocks ever occur.
    rows = min(rows, max(8, (n_rows // 8) * 8))
    # Keep >= ~4 grid steps where N permits so v7x's two TensorCores get work.
    if n_rows >= 32:
        rows = min(rows, max(8, _round_up(-(-n_rows // 4), 8)))
    return rows


# ----------------------------------------------------------------------------
# Streamed pass 1: per-column min/max partial reduction (K and V fused).
# Ragged tail is masked in-kernel (no host-side padding copies).
# ----------------------------------------------------------------------------
def _make_minmax_kernel(n_rows, tile_n, h):
    ragged = (n_rows % tile_n) != 0

    def kernel(k_ref, v_ref, stats_ref):
        k = k_ref[...].astype(jnp.float32)
        v = v_ref[...].astype(jnp.float32)
        if ragged:
            row0 = pl.program_id(0) * tile_n
            rows = lax.broadcasted_iota(jnp.int32, (tile_n, h), 0) + row0
            valid = rows < n_rows
            kmin_src = jnp.where(valid, k, jnp.inf)
            kmax_src = jnp.where(valid, k, -jnp.inf)
            vmin_src = jnp.where(valid, v, jnp.inf)
            vmax_src = jnp.where(valid, v, -jnp.inf)
        else:
            kmin_src = kmax_src = k
            vmin_src = vmax_src = v
        st = jnp.concatenate(
            [jnp.min(kmin_src, axis=0, keepdims=True),
             jnp.max(kmax_src, axis=0, keepdims=True),
             jnp.min(vmin_src, axis=0, keepdims=True),
             jnp.max(vmax_src, axis=0, keepdims=True)],
            axis=0)                                           # (4, H)
        # Duplicate to 8 sublanes -> full, unmasked tile store.
        stats_ref[...] = jnp.concatenate([st, st], axis=0)[None, :, :]  # (1,8,H)

    return kernel


def _minmax_pass(kf, vf, tile_n, vmem_cap):
    n, h = kf.shape
    n_tiles = pl.cdiv(n, tile_n)
    return pl.pallas_call(
        _make_minmax_kernel(n, tile_n, h),
        out_shape=jax.ShapeDtypeStruct((n_tiles, 8, h), jnp.float32),
        grid=(n_tiles,),
        in_specs=[pl.BlockSpec((tile_n, h), lambda r: (r, 0)),
                  pl.BlockSpec((tile_n, h), lambda r: (r, 0))],
        out_specs=pl.BlockSpec((1, 8, h), lambda r: (r, 0, 0)),
        compiler_params=pltpu.CompilerParams(
            dimension_semantics=("parallel",),
            vmem_limit_bytes=vmem_cap),
    )(kf, vf)


# ----------------------------------------------------------------------------
# Glue: vectorized per-group qparams from per-column min/max.
#   table rows: [k_scale, k_inv, k_zp, k_bias, v_scale, v_inv, v_zp, v_bias]
#   with bias = -zp * scale so pass 2 dequantizes as q*scale + bias.
# ----------------------------------------------------------------------------
def _group_qparam_table(stats, group, h, qmin, qmax, symmetric):
    col_kmin = jnp.min(stats[:, 0, :], axis=0)
    col_kmax = jnp.max(stats[:, 1, :], axis=0)
    col_vmin = jnp.min(stats[:, 2, :], axis=0)
    col_vmax = jnp.max(stats[:, 3, :], axis=0)
    n_groups = -(-h // group)
    pad = n_groups * group - h

    def per_tensor(cmin, cmax):
        if pad:
            cmin = jnp.concatenate([cmin, jnp.full((pad,), jnp.inf, jnp.float32)])
            cmax = jnp.concatenate([cmax, jnp.full((pad,), -jnp.inf, jnp.float32)])
        gmin = jnp.min(cmin.reshape(n_groups, group), axis=1)
        gmax = jnp.max(cmax.reshape(n_groups, group), axis=1)
        gmax = jnp.where(gmax == gmin, gmin + 1e-5, gmax)   # torch tie-break
        if symmetric:
            amax = jnp.maximum(jnp.abs(gmin), jnp.abs(gmax))
            scale = 2.0 * amax / (qmax - qmin)
            zp = jnp.zeros_like(scale)
        else:
            scale = (gmax - gmin) / (qmax - qmin)
            # torch keeps zero_point as an (unclamped) float; so do we.
            zp = qmin - jnp.round(gmin / scale)
        inv = 1.0 / scale                                    # exact reciprocal
        bias = -zp * scale

        def expand(g):
            return jnp.repeat(g, group)[:h]

        return expand(scale), expand(inv), expand(zp), expand(bias)

    ks, ki, kz, kb = per_tensor(col_kmin, col_kmax)
    vs, vi, vz, vb = per_tensor(col_vmin, col_vmax)
    return jnp.stack([ks, ki, kz, kb, vs, vi, vz, vb], axis=0)   # (8, H) f32


# ----------------------------------------------------------------------------
# Streamed pass 2: elementwise quantize-dequantize (K and V fused).
# Out-of-bounds rows of a ragged last block are dropped by Pallas on store.
# ----------------------------------------------------------------------------
def _qdq_kernel(qp_ref, k_ref, v_ref, ko_ref, vo_ref, *, qmin, qmax):
    qp = qp_ref[...]                                   # (8, H) parameter table

    def qdq(x, base):
        scale = qp[base:base + 1, :]
        inv = qp[base + 1:base + 2, :]
        zp = qp[base + 2:base + 3, :]
        bias = qp[base + 3:base + 4, :]
        q = jnp.clip(jnp.round(x * inv + zp), qmin, qmax)
        return q * scale + bias         # == (q - zp) * scale, one VALU op fewer

    ko_ref[...] = qdq(k_ref[...].astype(jnp.float32), 0).astype(ko_ref.dtype)
    vo_ref[...] = qdq(v_ref[...].astype(jnp.float32), 4).astype(vo_ref.dtype)


def _qdq_pass(qparams, kf, vf, tile_n, qmin, qmax, vmem_cap):
    n, h = kf.shape
    n_tiles = pl.cdiv(n, tile_n)
    kernel = functools.partial(_qdq_kernel, qmin=qmin, qmax=qmax)
    return pl.pallas_call(
        kernel,
        out_shape=(jax.ShapeDtypeStruct((n, h), kf.dtype),
                   jax.ShapeDtypeStruct((n, h), vf.dtype)),
        grid=(n_tiles,),
        in_specs=[pl.BlockSpec((8, h), lambda r: (0, 0)),        # resident table
                  pl.BlockSpec((tile_n, h), lambda r: (r, 0)),
                  pl.BlockSpec((tile_n, h), lambda r: (r, 0))],
        out_specs=(pl.BlockSpec((tile_n, h), lambda r: (r, 0)),
                   pl.BlockSpec((tile_n, h), lambda r: (r, 0))),
        compiler_params=pltpu.CompilerParams(
            dimension_semantics=("parallel",),
            vmem_limit_bytes=vmem_cap),
    )(qparams, kf, vf)


# ----------------------------------------------------------------------------
# Fully-fused small-N fast path: one pallas_call, K/V read and written exactly
# once, per-group stats/qparams never leave VMEM.
# ----------------------------------------------------------------------------
def _make_fused_kernel(h, group, qmin, qmax, symmetric):
    def kernel(k_ref, v_ref, ko_ref, vo_ref):
        col_ids = lax.broadcasted_iota(jnp.int32, (1, h), 1)

        def qparams(x):
            cmin = jnp.min(x, axis=0, keepdims=True)           # (1, H)
            cmax = jnp.max(x, axis=0, keepdims=True)
            scale = jnp.zeros((1, h), jnp.float32)
            inv = jnp.zeros((1, h), jnp.float32)
            zp = jnp.zeros((1, h), jnp.float32)
            for start in range(0, h, group):
                end = min(start + group, h)
                in_g = (col_ids >= start) & (col_ids < end)
                gmin = jnp.min(jnp.where(in_g, cmin, jnp.inf),
                               axis=1, keepdims=True)
                gmax = jnp.max(jnp.where(in_g, cmax, -jnp.inf),
                               axis=1, keepdims=True)
                gmax = jnp.where(gmax == gmin, gmin + 1e-5, gmax)
                if symmetric:
                    amax = jnp.maximum(jnp.abs(gmin), jnp.abs(gmax))
                    g_scale = 2.0 * amax / (qmax - qmin)
                    g_zp = jnp.zeros_like(g_scale)
                else:
                    g_scale = (gmax - gmin) / (qmax - qmin)
                    g_zp = qmin - jnp.round(gmin / g_scale)
                scale = jnp.where(in_g, g_scale, scale)
                inv = jnp.where(in_g, 1.0 / g_scale, inv)
                zp = jnp.where(in_g, g_zp, zp)
            return scale, inv, zp

        def qdq(x, scale, inv, zp):
            q = jnp.clip(jnp.round(x * inv + zp), qmin, qmax)
            return (q - zp) * scale

        k = k_ref[...].astype(jnp.float32)
        ks, ki, kz = qparams(k)
        ko_ref[...] = qdq(k, ks, ki, kz).astype(ko_ref.dtype)

        v = v_ref[...].astype(jnp.float32)
        vs, vi, vz = qparams(v)
        vo_ref[...] = qdq(v, vs, vi, vz).astype(vo_ref.dtype)

    return kernel


def _fused_pass(kf, vf, group, qmin, qmax, symmetric, vmem_cap):
    n, h = kf.shape
    kernel = _make_fused_kernel(h, group, qmin, qmax, symmetric)
    return pl.pallas_call(
        kernel,
        out_shape=(jax.ShapeDtypeStruct((n, h), kf.dtype),
                   jax.ShapeDtypeStruct((n, h), vf.dtype)),
        grid=(1,),
        in_specs=[pl.BlockSpec((n, h), lambda i: (0, 0)),
                  pl.BlockSpec((n, h), lambda i: (0, 0))],
        out_specs=(pl.BlockSpec((n, h), lambda i: (0, 0)),
                   pl.BlockSpec((n, h), lambda i: (0, 0))),
        compiler_params=pltpu.CompilerParams(
            dimension_semantics=("arbitrary",),
            vmem_limit_bytes=vmem_cap),
    )(kf, vf)


# ----------------------------------------------------------------------------
# Module wrapper
# ----------------------------------------------------------------------------
def make_quantized_compressor(hidden_size: int,
                              bits: int = 8,
                              group_size: int = 128,
                              symmetric: bool = False,
                              dynamic: bool = True,
                              fused_vmem_budget_bytes=None):
    """Returns forward(keys, values) matching QuantizedCompressor.forward."""
    if not dynamic:
        # TODO(synk): dynamic=False keeps host-side calibration state
        # (self.scale / self.zero_point / self.calibrated); not implemented.
        raise NotImplementedError("only dynamic=True is implemented")
    # Matches torch: group derives from the constructor's hidden_size even if
    # the runtime tensor's last dim differs (the torch module does the same).
    group = min(group_size, hidden_size)
    qmin, qmax = _qrange(bits, symmetric)
    step_budget, vmem_cap = _generation_params()
    fused_budget = step_budget if fused_vmem_budget_bytes is None \
        else fused_vmem_budget_bytes

    @jax.jit
    def forward(keys, values, importance=None):
        del importance                     # unused, as in the torch module
        original_shape = keys.shape
        h = original_shape[-1]
        kf = keys.reshape(-1, h)
        vf = values.reshape(-1, h)
        n = kf.shape[0]
        itemsize = kf.dtype.itemsize

        # Small-N fast path: K & V in + out + f32 working copies fit in VMEM.
        if (16 * itemsize + 12) * n * h <= fused_budget:
            dqk, dqv = _fused_pass(kf, vf, group, qmin, qmax, symmetric,
                                   vmem_cap)
        else:
            # Pass 1 streams only the two inputs (tiny output) -> bigger tile.
            tile1 = _choose_row_tile(n, h, itemsize, step_budget, n_streamed=2)
            tile2 = _choose_row_tile(n, h, itemsize, step_budget, n_streamed=4)
            stats = _minmax_pass(kf, vf, tile1, vmem_cap)
            qparams = _group_qparam_table(stats, group, h, qmin, qmax,
                                          symmetric)
            dqk, dqv = _qdq_pass(qparams, kf, vf, tile2, qmin, qmax, vmem_cap)

        return dqk.reshape(original_shape), dqv.reshape(original_shape)

    return forward


# ----------------------------------------------------------------------------
# Pure-JAX, torch-faithful reference (uses x / scale, like the module)
# ----------------------------------------------------------------------------
def _reference_forward(keys, values, *, group_size, bits, symmetric):
    qmin, qmax = _qrange(bits, symmetric)

    def qdq(x):
        x_min = jnp.min(x)
        x_max = jnp.max(x)
        x_max = jnp.where(x_max == x_min, x_min + 1e-5, x_max)
        if symmetric:
            amax = jnp.maximum(jnp.abs(x_min), jnp.abs(x_max))
            scale = 2.0 * amax / (qmax - qmin)
            zp = 0.0
        else:
            scale = (x_max - x_min) / (qmax - qmin)
            zp = qmin - jnp.round(x_min / scale)
        q = jnp.clip(jnp.round(x / scale + zp), qmin, qmax)
        return (q - zp) * scale, scale

    def by_groups(t):
        shp = t.shape
        tf = t.reshape(-1, shp[-1])
        cols, scales = [], []
        for i in range(0, shp[-1], group_size):
            end = min(i + group_size, shp[-1])
            dq, s = qdq(tf[:, i:end])
            cols.append(dq)
            scales.append(jnp.full((end - i,), s, jnp.float32))
        return (jnp.concatenate(cols, axis=-1).reshape(shp),
                jnp.concatenate(scales))

    rk, sk = by_groups(keys)
    rv, sv = by_groups(values)
    return rk, rv, sk, sv


def _check_close(dq, ref, scale_cols, name):
    err = jnp.abs(dq.astype(jnp.float32) - ref.astype(jnp.float32))
    # The kernel multiplies by the exact precomputed 1/scale instead of
    # dividing by scale; at worst that flips round() by one LSB right at a
    # .5 boundary, i.e. a difference of exactly one quantization step.
    excess = float(jnp.max(err - scale_cols * 1.001 - 1e-6))
    frac_mismatch = float(jnp.mean((err > 1e-5).astype(jnp.float32)))
    assert excess <= 0.0, f"{name}: error exceeds one quantization step ({excess})"
    assert frac_mismatch < 1e-2, f"{name}: too many mismatches ({frac_mismatch})"


if __name__ == "__main__":
    # Small shapes consistent with the module's forward: keys/values [B, S, H].
    B, S, H = 2, 8, 256
    GROUP, BITS = 128, 8

    key = jax.random.PRNGKey(0)
    k1, k2, k3, k4 = jax.random.split(key, 4)
    keys = jax.random.normal(k1, (B, S, H), dtype=jnp.float32)
    values = jax.random.normal(k2, (B, S, H), dtype=jnp.float32)

    ref_k, ref_v, k_scales, v_scales = _reference_forward(
        keys, values, group_size=min(GROUP, H), bits=BITS, symmetric=False)

    # 1) Default compressor: small N -> fully fused single-kernel fast path.
    compressor = make_quantized_compressor(
        hidden_size=H, bits=BITS, group_size=GROUP, symmetric=False, dynamic=True)
    dq_keys, dq_values = compressor(keys, values)
    jax.block_until_ready((dq_keys, dq_values))
    assert dq_keys.shape == keys.shape and dq_values.shape == values.shape
    _check_close(dq_keys, ref_k, k_scales, "fused/keys")
    _check_close(dq_values, ref_v, v_scales, "fused/values")

    # 2) Forced streamed two-pass path (exercises min/max pass + glue + qdq).
    compressor_streamed = make_quantized_compressor(
        hidden_size=H, bits=BITS, group_size=GROUP, symmetric=False,
        dynamic=True, fused_vmem_budget_bytes=0)
    dq_keys, dq_values = compressor_streamed(keys, values)
    jax.block_until_ready((dq_keys, dq_values))
    _check_close(dq_keys, ref_k, k_scales, "streamed/keys")
    _check_close(dq_values, ref_v, v_scales, "streamed/values")

    # 3) Ragged N (B*S not a multiple of the row tile), both paths.
    keys_r = jax.random.normal(k3, (B, 7, H), dtype=jnp.float32)
    values_r = jax.random.normal(k4, (B, 7, H), dtype=jnp.float32)
    rk_r, rv_r, sk_r, sv_r = _reference_forward(
        keys_r, values_r, group_size=min(GROUP, H), bits=BITS, symmetric=False)

    dq_keys, dq_values = compressor(keys_r, values_r)
    jax.block_until_ready((dq_keys, dq_values))
    _check_close(dq_keys, rk_r, sk_r, "fused-ragged/keys")
    _check_close(dq_values, rv_r, sv_r, "fused-ragged/values")

    dq_keys, dq_values = compressor_streamed(keys_r, values_r)
    jax.block_until_ready((dq_keys, dq_values))
    _check_close(dq_keys, rk_r, sk_r, "streamed-ragged/keys")
    _check_close(dq_values, rv_r, sv_r, "streamed-ragged/values")

    print("KERNEL_OK")
</pallas_src>

<mosaic_0001>
module attributes {stable_mosaic.version = 11 : i64} {
  func.func @kernel(%arg0: i32, %arg1: memref<16x256xf32, #tpu.memory_space<vmem>>, %arg2: memref<16x256xf32, #tpu.memory_space<vmem>>, %arg3: memref<16x256xf32, #tpu.memory_space<vmem>>, %arg4: memref<16x256xf32, #tpu.memory_space<vmem>>) attributes {dimension_semantics = [#tpu.dimension_semantics<arbitrary>], iteration_bounds = array<i64: 1>, scalar_prefetch = 0 : i64, scratch_operands = 0 : i64, tpu.core_type = #tpu.core_type<tc>, window_params = [{pipeline_mode = #tpu.pipeline_mode<synchronous>, transform_indices = @transform_0, window_bounds = array<i64: 16, 256>}, {pipeline_mode = #tpu.pipeline_mode<synchronous>, transform_indices = @transform_1, window_bounds = array<i64: 16, 256>}, {pipeline_mode = #tpu.pipeline_mode<synchronous>, transform_indices = @transform_2, window_bounds = array<i64: 16, 256>}, {pipeline_mode = #tpu.pipeline_mode<synchronous>, transform_indices = @transform_3, window_bounds = array<i64: 16, 256>}]} {
    %0 = tpu.iota {dimensions = array<i32: 1>} : vector<1x256xi32>
    %c0 = arith.constant 0 : index
    %c0_0 = arith.constant 0 : index
    %1 = vector.load %arg1[%c0, %c0_0] : memref<16x256xf32, #tpu.memory_space<vmem>>, vector<16x256xf32>
    %cst = arith.constant dense<0x7F800000> : vector<256xf32>
    %2 = vector.multi_reduction <minimumf>, %1, %cst [0] : vector<16x256xf32> to vector<256xf32>
    %3 = vector.shape_cast %2 : vector<256xf32> to vector<1x256xf32>
    %cst_1 = arith.constant dense<0xFF800000> : vector<256xf32>
    %4 = vector.multi_reduction <maximumf>, %1, %cst_1 [0] : vector<16x256xf32> to vector<256xf32>
    %5 = vector.shape_cast %4 : vector<256xf32> to vector<1x256xf32>
    %cst_2 = arith.constant 0.000000e+00 : f32
    %6 = vector.broadcast %cst_2 : f32 to vector<1x256xf32>
    %cst_3 = arith.constant 0.000000e+00 : f32
    %7 = vector.broadcast %cst_3 : f32 to vector<1x256xf32>
    %cst_4 = arith.constant 0.000000e+00 : f32
    %8 = vector.broadcast %cst_4 : f32 to vector<1x256xf32>
    %c0_i32 = arith.constant 0 : i32
    %9 = vector.broadcast %c0_i32 : i32 to vector<1x256xi32>
    %10 = arith.cmpi sge, %0, %9 : vector<1x256xi32>
    %c128_i32 = arith.constant 128 : i32
    %11 = vector.broadcast %c128_i32 : i32 to vector<1x256xi32>
    %12 = arith.cmpi slt, %0, %11 : vector<1x256xi32>
    %13 = arith.andi %10, %12 : vector<1x256xi1>
    %cst_5 = arith.constant 0x7F800000 : f32
    %14 = vector.broadcast %cst_5 : f32 to vector<1x256xf32>
    %15 = arith.select %13, %3, %14 : vector<1x256xi1>, vector<1x256xf32>
    %cst_6 = arith.constant dense<0x7F800000> : vector<1xf32>
    %16 = vector.multi_reduction <minimumf>, %15, %cst_6 [1] : vector<1x256xf32> to vector<1xf32>
    %17 = vector.shape_cast %16 : vector<1xf32> to vector<1x1xf32>
    %cst_7 = arith.constant 0xFF800000 : f32
    %18 = vector.broadcast %cst_7 : f32 to vector<1x256xf32>
    %19 = arith.select %13, %5, %18 : vector<1x256xi1>, vector<1x256xf32>
    %cst_8 = arith.constant dense<0xFF800000> : vector<1xf32>
    %20 = vector.multi_reduction <maximumf>, %19, %cst_8 [1] : vector<1x256xf32> to vector<1xf32>
    %21 = vector.shape_cast %20 : vector<1xf32> to vector<1x1xf32>
    %22 = arith.cmpf oeq, %21, %17 : vector<1x1xf32>
    %cst_9 = arith.constant 9.99999974E-6 : f32
    %23 = vector.broadcast %cst_9 : f32 to vector<1x1xf32>
    %24 = arith.addf %17, %23 : vector<1x1xf32>
    %25 = arith.select %22, %24, %21 : vector<1x1xi1>, vector<1x1xf32>
    %26 = arith.subf %25, %17 : vector<1x1xf32>
    %cst_10 = arith.constant 2.550000e+02 : f32
    %27 = vector.broadcast %cst_10 : f32 to vector<1x1xf32>
    %28 = arith.divf %26, %27 : vector<1x1xf32>
    %29 = arith.divf %17, %28 : vector<1x1xf32>
    %30 = math.roundeven %29 : vector<1x1xf32>
    %cst_11 = arith.constant 0.000000e+00 : f32
    %31 = vector.broadcast %cst_11 : f32 to vector<1x1xf32>
    %32 = arith.subf %31, %30 : vector<1x1xf32>
    %33 = vector.shape_cast %28 : vector<1x1xf32> to vector<1x1xf32>
    %34 = vector.broadcast %33 : vector<1x1xf32> to vector<1x256xf32>
    %35 = arith.select %13, %34, %6 : vector<1x256xi1>, vector<1x256xf32>
    %cst_12 = arith.constant 1.000000e+00 : f32
    %36 = vector.broadcast %cst_12 : f32 to vector<1x1xf32>
    %37 = arith.divf %36, %28 : vector<1x1xf32>
    %38 = vector.shape_cast %37 : vector<1x1xf32> to vector<1x1xf32>
    %39 = vector.broadcast %38 : vector<1x1xf32> to vector<1x256xf32>
    %40 = arith.select %13, %39, %7 : vector<1x256xi1>, vector<1x256xf32>
    %41 = vector.shape_cast %32 : vector<1x1xf32> to vector<1x1xf32>
    %42 = vector.broadcast %41 : vector<1x1xf32> to vector<1x256xf32>
    %43 = arith.select %13, %42, %8 : vector<1x256xi1>, vector<1x256xf32>
    %c128_i32_13 = arith.constant 128 : i32
    %44 = vector.broadcast %c128_i32_13 : i32 to vector<1x256xi32>
    %45 = arith.cmpi sge, %0, %44 : vector<1x256xi32>
    %c256_i32 = arith.constant 256 : i32
    %46 = vector.broadcast %c256_i32 : i32 to vector<1x256xi32>
    %47 = arith.cmpi slt, %0, %46 : vector<1x256xi32>
    %48 = arith.andi %45, %47 : vector<1x256xi1>
    %cst_14 = arith.constant 0x7F800000 : f32
    %49 = vector.broadcast %cst_14 : f32 to vector<1x256xf32>
    %50 = arith.select %48, %3, %49 : vector<1x256xi1>, vector<1x256xf32>
    %cst_15 = arith.constant dense<0x7F800000> : vector<1xf32>
    %51 = vector.multi_reduction <minimumf>, %50, %cst_15 [1] : vector<1x256xf32> to vector<1xf32>
    %52 = vector.shape_cast %51 : vector<1xf32> to vector<1x1xf32>
    %cst_16 = arith.constant 0xFF800000 : f32
    %53 = vector.broadcast %cst_16 : f32 to vector<1x256xf32>
    %54 = arith.select %48, %5, %53 : vector<1x256xi1>, vector<1x256xf32>
    %cst_17 = arith.constant dense<0xFF800000> : vector<1xf32>
    %55 = vector.multi_reduction <maximumf>, %54, %cst_17 [1] : vector<1x256xf32> to vector<1xf32>
    %56 = vector.shape_cast %55 : vector<1xf32> to vector<1x1xf32>
    %57 = arith.cmpf oeq, %56, %52 : vector<1x1xf32>
    %cst_18 = arith.constant 9.99999974E-6 : f32
    %58 = vector.broadcast %cst_18 : f32 to vector<1x1xf32>
    %59 = arith.addf %52, %58 : vector<1x1xf32>
    %60 = arith.select %57, %59, %56 : vector<1x1xi1>, vector<1x1xf32>
    %61 = arith.subf %60, %52 : vector<1x1xf32>
    %cst_19 = arith.constant 2.550000e+02 : f32
    %62 = vector.broadcast %cst_19 : f32 to vector<1x1xf32>
    %63 = arith.divf %61, %62 : vector<1x1xf32>
    %64 = arith.divf %52, %63 : vector<1x1xf32>
    %65 = math.roundeven %64 : vector<1x1xf32>
    %cst_20 = arith.constant 0.000000e+00 : f32
    %66 = vector.broadcast %cst_20 : f32 to vector<1x1xf32>
    %67 = arith.subf %66, %65 : vector<1x1xf32>
    %68 = vector.shape_cast %63 : vector<1x1xf32> to vector<1x1xf32>
    %69 = vector.broadcast %68 : vector<1x1xf32> to vector<1x256xf32>
    %70 = arith.select %48, %69, %35 : vector<1x256xi1>, vector<1x256xf32>
    %cst_21 = arith.constant 1.000000e+00 : f32
    %71 = vector.broadcast %cst_21 : f32 to vector<1x1xf32>
    %72 = arith.divf %71, %63 : vector<1x1xf32>
    %73 = vector.shape_cast %72 : vector<1x1xf32> to vector<1x1xf32>
    %74 = vector.broadcast %73 : vector<1x1xf32> to vector<1x256xf32>
    %75 = arith.select %48, %74, %40 : vector<1x256xi1>, vector<1x256xf32>
    %76 = vector.shape_cast %67 : vector<1x1xf32> to vector<1x1xf32>
    %77 = vector.broadcast %76 : vector<1x1xf32> to vector<1x256xf32>
    %78 = arith.select %48, %77, %43 : vector<1x256xi1>, vector<1x256xf32>
    %79 = vector.broadcast %75 : vector<1x256xf32> to vector<16x256xf32>
    %80 = arith.mulf %1, %79 : vector<16x256xf32>
    %81 = vector.broadcast %78 : vector<1x256xf32> to vector<16x256xf32>
    %82 = arith.addf %80, %81 : vector<16x256xf32>
    %83 = math.roundeven %82 : vector<16x256xf32>
    %cst_22 = arith.constant 0.000000e+00 : f32
    %cst_23 = arith.constant 2.550000e+02 : f32
    %84 = vector.broadcast %cst_22 : f32 to vector<16x256xf32>
    %85 = arith.maximumf %84, %83 : vector<16x256xf32>
    %86 = vector.broadcast %cst_23 : f32 to vector<16x256xf32>
    %87 = arith.minimumf %86, %85 : vector<16x256xf32>
    %88 = vector.broadcast %78 : vector<1x256xf32> to vector<16x256xf32>
    %89 = arith.subf %87, %88 : vector<16x256xf32>
    %90 = vector.broadcast %70 : vector<1x256xf32> to vector<16x256xf32>
    %91 = arith.mulf %89, %90 : vector<16x256xf32>
    %c0_24 = arith.constant 0 : index
    %c0_25 = arith.constant 0 : index
    %92 = vector.load %arg3[%c0_24, %c0_25] : memref<16x256xf32, #tpu.memory_space<vmem>>, vector<16x256xf32>
    tpu.vector_store %arg3[%c0_24, %c0_25], %91 {strides = array<i32>} : memref<16x256xf32, #tpu.memory_space<vmem>>, vector<16x256xf32>,
    %c0_26 = arith.constant 0 : index
    %c0_27 = arith.constant 0 : index
    %93 = vector.load %arg2[%c0_26, %c0_27] : memref<16x256xf32, #tpu.memory_space<vmem>>, vector<16x256xf32>
    %cst_28 = arith.constant dense<0x7F800000> : vector<256xf32>
    %94 = vector.multi_reduction <minimumf>, %93, %cst_28 [0] : vector<16x256xf32> to vector<256xf32>
    %95 = vector.shape_cast %94 : vector<256xf32> to vector<1x256xf32>
    %cst_29 = arith.constant dense<0xFF800000> : vector<256xf32>
    %96 = vector.multi_reduction <maximumf>, %93, %cst_29 [0] : vector<16x256xf32> to vector<256xf32>
    %97 = vector.shape_cast %96 : vector<256xf32> to vector<1x256xf32>
    %cst_30 = arith.constant 0.000000e+00 : f32
    %98 = vector.broadcast %cst_30 : f32 to vector<1x256xf32>
    %cst_31 = arith.constant 0.000000e+00 : f32
    %99 = vector.broadcast %cst_31 : f32 to vector<1x256xf32>
    %cst_32 = arith.constant 0.000000e+00 : f32
    %100 = vector.broadcast %cst_32 : f32 to vector<1x256xf32>
    %c0_i32_33 = arith.constant 0 : i32
    %101 = vector.broadcast %c0_i32_33 : i32 to vector<1x256xi32>
    %102 = arith.cmpi sge, %0, %101 : vector<1x256xi32>
    %c128_i32_34 = arith.constant 128 : i32
    %103 = vector.broadcast %c128_i32_34 : i32 to vector<1x256xi32>
    %104 = arith.cmpi slt, %0, %103 : vector<1x256xi32>
    %105 = arith.andi %102, %104 : vector<1x256xi1>
    %cst_35 = arith.constant 0x7F800000 : f32
    %106 = vector.broadcast %cst_35 : f32 to vector<1x256xf32>
    %107 = arith.select %105, %95, %106 : vector<1x256xi1>, vector<1x256xf32>
    %cst_36 = arith.constant dense<0x7F800000> : vector<1xf32>
    %108 = vector.multi_reduction <minimumf>, %107, %cst_36 [1] : vector<1x256xf32> to vector<1xf32>
    %109 = vector.shape_cast %108 : vector<1xf32> to vector<1x1xf32>
    %cst_37 = arith.constant 0xFF800000 : f32
    %110 = vector.broadcast %cst_37 : f32 to vector<1x256xf32>
    %111 = arith.select %105, %97, %110 : vector<1x256xi1>, vector<1x256xf32>
    %cst_38 = arith.constant dense<0xFF800000> : vector<1xf32>
    %112 = vector.multi_reduction <maximumf>, %111, %cst_38 [1] : vector<1x256xf32> to vector<1xf32>
    %113 = vector.shape_cast %112 : vector<1xf32> to vector<1x1xf32>
    %114 = arith.cmpf oeq, %113, %109 : vector<1x1xf32>
    %cst_39 = arith.constant 9.99999974E-6 : f32
    %115 = vector.broadcast %cst_39 : f32 to vector<1x1xf32>
    %116 = arith.addf %109, %115 : vector<1x1xf32>
    %117 = arith.select %114, %116, %113 : vector<1x1xi1>, vector<1x1xf32>
    %118 = arith.subf %117, %109 : vector<1x1xf32>
    %cst_40 = arith.constant 2.550000e+02 : f32
    %119 = vector.broadcast %cst_40 : f32 to vector<1x1xf32>
    %120 = arith.divf %118, %119 : vector<1x1xf32>
    %121 = arith.divf %109, %120 : vector<1x1xf32>
    %122 = math.roundeven %121 : vector<1x1xf32>
    %cst_41 = arith.constant 0.000000e+00 : f32
    %123 = vector.broadcast %cst_41 : f32 to vector<1x1xf32>
    %124 = arith.subf %123, %122 : vector<1x1xf32>
    %125 = vector.shape_cast %120 : vector<1x1xf32> to vector<1x1xf32>
    %126 = vector.broadcast %125 : vector<1x1xf32> to vector<1x256xf32>
    %127 = arith.select %105, %126, %98 : vector<1x256xi1>, vector<1x256xf32>
    %cst_42 = arith.constant 1.000000e+00 : f32
    %128 = vector.broadcast %cst_42 : f32 to vector<1x1xf32>
    %129 = arith.divf %128, %120 : vector<1x1xf32>
    %130 = vector.shape_cast %129 : vector<1x1xf32> to vector<1x1xf32>
    %131 = vector.broadcast %130 : vector<1x1xf32> to vector<1x256xf32>
    %132 = arith.select %105, %131, %99 : vector<1x256xi1>, vector<1x256xf32>
    %133 = vector.shape_cast %124 : vector<1x1xf32> to vector<1x1xf32>
    %134 = vector.broadcast %133 : vector<1x1xf32> to vector<1x256xf32>
    %135 = arith.select %105, %134, %100 : vector<1x256xi1>, vector<1x256xf32>
    %c128_i32_43 = arith.constant 128 : i32
    %136 = vector.broadcast %c128_i32_43 : i32 to vector<1x256xi32>
    %137 = arith.cmpi sge, %0, %136 : vector<1x256xi32>
    %c256_i32_44 = arith.constant 256 : i32
    %138 = vector.broadcast %c256_i32_44 : i32 to vector<1x256xi32>
    %139 = arith.cmpi slt, %0, %138 : vector<1x256xi32>
    %140 = arith.andi %137, %139 : vector<1x256xi1>
    %cst_45 = arith.constant 0x7F800000 : f32
    %141 = vector.broadcast %cst_45 : f32 to vector<1x256xf32>
    %142 = arith.select %140, %95, %141 : vector<1x256xi1>, vector<1x256xf32>
    %cst_46 = arith.constant dense<0x7F800000> : vector<1xf32>
    %143 = vector.multi_reduction <minimumf>, %142, %cst_46 [1] : vector<1x256xf32> to vector<1xf32>
    %144 = vector.shape_cast %143 : vector<1xf32> to vector<1x1xf32>
    %cst_47 = arith.constant 0xFF800000 : f32
    %145 = vector.broadcast %cst_47 : f32 to vector<1x256xf32>
    %146 = arith.select %140, %97, %145 : vector<1x256xi1>, vector<1x256xf32>
    %cst_48 = arith.constant dense<0xFF800000> : vector<1xf32>
    %147 = vector.multi_reduction <maximumf>, %146, %cst_48 [1] : vector<1x256xf32> to vector<1xf32>
    %148 = vector.shape_cast %147 : vector<1xf32> to vector<1x1xf32>
    %149 = arith.cmpf oeq, %148, %144 : vector<1x1xf32>
    %cst_49 = arith.constant 9.99999974E-6 : f32
    %150 = vector.broadcast %cst_49 : f32 to vector<1x1xf32>
    %151 = arith.addf %144, %150 : vector<1x1xf32>
    %152 = arith.select %149, %151, %148 : vector<1x1xi1>, vector<1x1xf32>
    %153 = arith.subf %152, %144 : vector<1x1xf32>
    %cst_50 = arith.constant 2.550000e+02 : f32
    %154 = vector.broadcast %cst_50 : f32 to vector<1x1xf32>
    %155 = arith.divf %153, %154 : vector<1x1xf32>
    %156 = arith.divf %144, %155 : vector<1x1xf32>
    %157 = math.roundeven %156 : vector<1x1xf32>
    %cst_51 = arith.constant 0.000000e+00 : f32
    %158 = vector.broadcast %cst_51 : f32 to vector<1x1xf32>
    %159 = arith.subf %158, %157 : vector<1x1xf32>
    %160 = vector.shape_cast %155 : vector<1x1xf32> to vector<1x1xf32>
    %161 = vector.broadcast %160 : vector<1x1xf32> to vector<1x256xf32>
    %162 = arith.select %140, %161, %127 : vector<1x256xi1>, vector<1x256xf32>
    %cst_52 = arith.constant 1.000000e+00 : f32
    %163 = vector.broadcast %cst_52 : f32 to vector<1x1xf32>
    %164 = arith.divf %163, %155 : vector<1x1xf32>
    %165 = vector.shape_cast %164 : vector<1x1xf32> to vector<1x1xf32>
    %166 = vector.broadcast %165 : vector<1x1xf32> to vector<1x256xf32>
    %167 = arith.select %140, %166, %132 : vector<1x256xi1>, vector<1x256xf32>
    %168 = vector.shape_cast %159 : vector<1x1xf32> to vector<1x1xf32>
    %169 = vector.broadcast %168 : vector<1x1xf32> to vector<1x256xf32>
    %170 = arith.select %140, %169, %135 : vector<1x256xi1>, vector<1x256xf32>
    %171 = vector.broadcast %167 : vector<1x256xf32> to vector<16x256xf32>
    %172 = arith.mulf %93, %171 : vector<16x256xf32>
    %173 = vector.broadcast %170 : vector<1x256xf32> to vector<16x256xf32>
    %174 = arith.addf %172, %173 : vector<16x256xf32>
    %175 = math.roundeven %174 : vector<16x256xf32>
    %cst_53 = arith.constant 0.000000e+00 : f32
    %cst_54 = arith.constant 2.550000e+02 : f32
    %176 = vector.broadcast %cst_53 : f32 to vector<16x256xf32>
    %177 = arith.maximumf %176, %175 : vector<16x256xf32>
    %178 = vector.broadcast %cst_54 : f32 to vector<16x256xf32>
    %179 = arith.minimumf %178, %177 : vector<16x256xf32>
    %180 = vector.broadcast %170 : vector<1x256xf32> to vector<16x256xf32>
    %181 = arith.subf %179, %180 : vector<16x256xf32>
    %182 = vector.broadcast %162 : vector<1x256xf32> to vector<16x256xf32>
    %183 = arith.mulf %181, %182 : vector<16x256xf32>
    %c0_55 = arith.constant 0 : index
    %c0_56 = arith.constant 0 : index
    %184 = vector.load %arg4[%c0_55, %c0_56] : memref<16x256xf32, #tpu.memory_space<vmem>>, vector<16x256xf32>
    tpu.vector_store %arg4[%c0_55, %c0_56], %183 {strides = array<i32>} : memref<16x256xf32, #tpu.memory_space<vmem>>, vector<16x256xf32>,
    return
  }
  func.func @transform_0(%arg0: i32) -> (i32, i32) {
    %c0_i32 = arith.constant 0 : i32
    %c0_i32_0 = arith.constant 0 : i32
    %c0_i32_1 = arith.constant 0 : i32
    return %c0_i32, %c0_i32_0 : i32, i32
  }
  func.func @transform_1(%arg0: i32) -> (i32, i32) {
    %c0_i32 = arith.constant 0 : i32
    %c0_i32_0 = arith.constant 0 : i32
    %c0_i32_1 = arith.constant 0 : i32
    return %c0_i32, %c0_i32_0 : i32, i32
  }
  func.func @transform_2(%arg0: i32) -> (i32, i32) {
    %c0_i32 = arith.constant 0 : i32
    %c0_i32_0 = arith.constant 0 : i32
    %c0_i32_1 = arith.constant 0 : i32
    return %c0_i32, %c0_i32_0 : i32, i32
  }
  func.func @transform_3(%arg0: i32) -> (i32, i32) {
    %c0_i32 = arith.constant 0 : i32
    %c0_i32_0 = arith.constant 0 : i32
    %c0_i32_1 = arith.constant 0 : i32
    return %c0_i32, %c0_i32_0 : i32, i32
  }
}

</mosaic_0001>

<llo_original>
// kernel: forward.1
$region0: #{forward.1}
  #allocation0 [shape = 'u32[]', space=smem, size = 0x4, offset = 0x4, fixed_abs, tag = 'smem constant byte address 0x4 - core index']
  #allocation1 [shape = 'u32[72,128]{1,0:T(1,128)}', space=vmem, size = 0x9000, scoped, tag = 'internal scratch']
  %s0 = inlined_call_operand.hbm [shape: f32[16,256], index: 0, kind: input, shape index: {}]
  %s1 = inlined_call_operand.hbm [shape: f32[16,256], index: 1, kind: input, shape index: {}]
  %s2 = inlined_call_operand.hbm [shape: f32[16,256], index: 2, kind: output, shape index: {0}]
  %s3 = inlined_call_operand.hbm [shape: f32[16,256], index: 3, kind: output, shape index: {1}]
  %4 = xla_tuple %s2, %s3
  %s5 = sld [smem:[#allocation0]]
  $region34: #{forward.1} parent=0
    _
  %s7 = ssub.s32 1, %s5
  %s8 = scalar_select 0, %s7, %s5
  $region1: #{forward.1} parent=0
    #allocation2 [shape = 'u8[16384]{0}', space=vmem, size = 0x4000, scoped, tag = 'input window, operand 0, single buffered']
    #allocation3 [shape = 's32[1]{0}', space=sflag, size = 0x4, scoped, tag = 'scoped memory for forward.1']
    #allocation4 [shape = 's32[1]{0}', space=sflag, size = 0x4, scoped, tag = 'scoped memory for forward.1']
    #allocation5 [shape = 'u8[16384]{0}', space=vmem, size = 0x4000, scoped, tag = 'input window, operand 1, single buffered']
    #allocation6 [shape = 's32[1]{0}', space=sflag, size = 0x4, scoped, tag = 'scoped memory for forward.1']
    #allocation7 [shape = 'u8[16384]{0}', space=vmem, size = 0x4000, scoped, tag = 'output window, operand 0, single buffered']
    #allocation8 [shape = 'u8[16384]{0}', space=vmem, size = 0x4000, scoped, tag = 'output window, operand 1, single buffered']
    #allocation9 [shape = 's32[1]{0}', space=sflag, size = 0x4, scoped, tag = 'scoped memory for forward.1']
    %9 = vsyncpa [#allocation3], 0
    %10 = vsyncpa [#allocation6], 0
    %11 = vsyncpa [#allocation4], 0
    %12 = vsyncpa [#allocation9], 0
    // Predicated region
    $region2: #{forward.1} parent=1 // pred_check
      _
    $region3: #{forward.1} parent=1 // pred_check_branch
      %14 = sbr.rel (0) target = $region5
    $region4: #{forward.1} parent=1 // pred_region
      %16 = vsyncadd [#allocation3], 0
      %s17 = sshll.u32 %s0, 4
      %s18 = int_to_ptr.hbm [resolvable:$true] %s17
      %s19 = sshll.u32 [#allocation2], 4
      %s20 = int_to_ptr.vmem [resolvable:$true] %s19
      %25 = dma.hbm_to_vmem [thread:$0]  %s18, 512, %s20, [#allocation3], 256, 256, 16
    $region5: #{forward.1} parent=1 // pred_fallthru
      _
    // Predicated region
    $region6: #{forward.1} parent=1 // pred_check
      _
    $region7: #{forward.1} parent=1 // pred_check_branch
      %27 = sbr.rel (0) target = $region9
    $region8: #{forward.1} parent=1 // pred_region
      %29 = vsyncadd [#allocation6], 0
      %s30 = sshll.u32 %s1, 4
      %s31 = int_to_ptr.hbm [resolvable:$true] %s30
      %s32 = sshll.u32 [#allocation5], 4
      %s33 = int_to_ptr.vmem [resolvable:$true] %s32
      %38 = dma.hbm_to_vmem [thread:$0]  %s31, 512, %s33, [#allocation6], 256, 256, 16
    $region9: #{forward.1} parent=1 // pred_fallthru
      _
    // Predicated region
    $region10: #{forward.1} parent=1 // pred_check
      _
    $region11: #{forward.1} parent=1 // pred_check_branch
      %40 = sbr.rel (0) target = $region13
    $region12: #{forward.1} parent=1 // pred_region
      %42 = dma.done [#allocation3], 512
    $region13: #{forward.1} parent=1 // pred_fallthru
      _
    // Predicated region
    $region14: #{forward.1} parent=1 // pred_check
      _
    $region15: #{forward.1} parent=1 // pred_check_branch
      %44 = sbr.rel (0) target = $region17
    $region16: #{forward.1} parent=1 // pred_region
      %46 = dma.done [#allocation6], 512
    $region17: #{forward.1} parent=1 // pred_fallthru
      _
    %v47 = vlaneseq
    %v48 = vand.u32 %v47, 127
    %v49 = vadd.s32 %v48, 128
    %v50 = vld [vmem:[#allocation2] sm:$0xff]
    %v51 = vld [vmem:[#allocation2 + $0x8] sm:$0xff]
    %v52 = vld [vmem:[#allocation2 + $0x10] sm:$0xff]
    %v53 = vld [vmem:[#allocation2 + $0x18] sm:$0xff]
    %v54 = vmin.f32 %v50, %v52
    %v55 = vrot.slane %v54, 4
    %v56 = vmin.f32 %v54, %v55
    %v57 = vrot.slane %v56, 2
    %v58 = vmin.f32 %v56, %v57
    %v59 = vrot.slane %v58, 1
    %v60 = vmin.f32 %v58, %v59
    %v61 = vmin.f32 %v51, %v53
    %v62 = vrot.slane %v61, 4
    %v63 = vmin.f32 %v61, %v62
    %v64 = vrot.slane %v63, 2
    %v65 = vmin.f32 %v63, %v64
    %v66 = vrot.slane %v65, 1
    %v67 = vmin.f32 %v65, %v66
    %v68 = vmax.f32 %v50, %v52
    %v69 = vrot.slane %v68, 4
    %v70 = vmax.f32 %v68, %v69
    %v71 = vrot.slane %v70, 2
    %v72 = vmax.f32 %v70, %v71
    %v73 = vrot.slane %v72, 1
    %v74 = vmax.f32 %v72, %v73
    %v75 = vmax.f32 %v51, %v53
    %v76 = vrot.slane %v75, 4
    %v77 = vmax.f32 %v75, %v76
    %v78 = vrot.slane %v77, 2
    %v79 = vmax.f32 %v77, %v78
    %v80 = vrot.slane %v79, 1
    %v81 = vmax.f32 %v79, %v80
    %vm82 = vcmp.ge.s32.totalorder %v48, 0
    %vm83 = vcmp.ge.s32.totalorder %v49, 0
    %vm84 = vcmp.lt.s32.totalorder %v48, 128
    %vm85 = vcmp.lt.s32.totalorder %v49, 128
    %vm86 = vmand %vm82, %vm84
    %vm87 = vmand %vm83, %vm85
    %v88 = vsel %vm86, %v60, inf
    %v89 = vsel %vm87, %v67, inf
    %v90 = vmin.f32 %v88, %v89
    %91 = vmin.xlane.f32.xlu0 %v90
    %v92 = vpop.xlane.xlu0 %91
    %v93 = vsel %vm86, %v74, -inf
    %v94 = vsel %vm87, %v81, -inf
    %v95 = vmax.f32 %v93, %v94
    %96 = vmax.xlane.f32.xlu0 %v95
    %v97 = vpop.xlane.xlu0 %96
    %vm98 = vcmp.eq.f32.partialorder %v97, %v92
    %v99 = vadd.f32 %v92, 1e-05
    %v100 = vsel %vm98, %v99, %v97
    %v101 = vsub.f32 %v100, %v92
    %v102 = vrcp.pop 255.0
    %v103 = vmul.f32 255.0, %v102
    %v104 = vsub.f32 1.0, %v103
    %v105 = vmul.f32 %v102, %v104
    %v106 = vadd.f32 %v102, %v105
    %vm107 = vweird.f32 %v102
    %v108 = vsel %vm107, %v102, %v106
    %v109 = vmul.f32 %v101, %v108
    %v110 = vrcp.pop %v109
    %v111 = vmul.f32 %v109, %v110
    %v112 = vsub.f32 1.0, %v111
    %v113 = vmul.f32 %v110, %v112
    %v114 = vadd.f32 %v110, %v113
    %vm115 = vweird.f32 %v109
    %vm116 = vweird.f32 %v110
    %vm117 = vmor %vm115, %vm116
    %v118 = vsel %vm117, %v110, %v114
    %v119 = vand.u32 2147483647, %v109
    %vm120 = vcmp.eq.f32.partialorder %v119, 8.507059e+37
    %v121 = vand.u32 %v109, 2147483648
    %v122 = vor.u32 1.1754944e-38, %v121
    %v123 = vsel %vm120, %v122, %v118
    %v124 = vmul.f32 %v92, %v123
    %v125 = vround.ne.pseudo %v124
    %v126 = vsub.f32 0.0, %v125
    %v127 = vsel %vm86, %v109, 0.0
    %v128 = vsel %vm87, %v109, 0.0
    %v129 = vmul.f32 1.0, %v123
    %v130 = vsel %vm86, %v129, 0.0
    %v131 = vsel %vm87, %v129, 0.0
    %v132 = vsel %vm86, %v126, 0.0
    %v133 = vsel %vm87, %v126, 0.0
    %vm134 = vcmp.ge.s32.totalorder %v48, 128
    %vm135 = vcmp.ge.s32.totalorder %v49, 128
    %vm136 = vcmp.lt.s32.totalorder %v48, 256
    %vm137 = vcmp.lt.s32.totalorder %v49, 256
    %vm138 = vmand %vm134, %vm136
    %vm139 = vmand %vm135, %vm137
    %v140 = vsel %vm138, %v60, inf
    %v141 = vsel %vm139, %v67, inf
    %v142 = vmin.f32 %v140, %v141
    %143 = vmin.xlane.f32.xlu0 %v142
    %v144 = vpop.xlane.xlu0 %143
    %v145 = vsel %vm138, %v74, -inf
    %v146 = vsel %vm139, %v81, -inf
    %v147 = vmax.f32 %v145, %v146
    %148 = vmax.xlane.f32.xlu0 %v147
    %v149 = vpop.xlane.xlu0 %148
    %vm150 = vcmp.eq.f32.partialorder %v149, %v144
    %v151 = vadd.f32 %v144, 1e-05
    %v152 = vsel %vm150, %v151, %v149
    %v153 = vsub.f32 %v152, %v144
    %v154 = vmul.f32 %v153, %v108
    %v155 = vrcp.pop %v154
    %v156 = vmul.f32 %v154, %v155
    %v157 = vsub.f32 1.0, %v156
    %v158 = vmul.f32 %v155, %v157
    %v159 = vadd.f32 %v155, %v158
    %vm160 = vweird.f32 %v154
    %vm161 = vweird.f32 %v155
    %vm162 = vmor %vm160, %vm161
    %v163 = vsel %vm162, %v155, %v159
    %v164 = vand.u32 2147483647, %v154
    %vm165 = vcmp.eq.f32.partialorder %v164, 8.507059e+37
    %v166 = vand.u32 %v154, 2147483648
    %v167 = vor.u32 1.1754944e-38, %v166
    %v168 = vsel %vm165, %v167, %v163
    %v169 = vmul.f32 %v144, %v168
    %v170 = vround.ne.pseudo %v169
    %v171 = vsub.f32 0.0, %v170
    %v172 = vsel %vm138, %v154, %v127
    %v173 = vsel %vm139, %v154, %v128
    %v174 = vmul.f32 1.0, %v168
    %v175 = vsel %vm138, %v174, %v130
    %v176 = vsel %vm139, %v174, %v131
    %v177 = vsel %vm138, %v171, %v132
    %v178 = vsel %vm139, %v171, %v133
    %v179 = vmul.f32 %v50, %v175
    %v180 = vmul.f32 %v51, %v176
    %v181 = vmul.f32 %v52, %v175
    %v182 = vmul.f32 %v53, %v176
    %v183 = vadd.f32 %v179, %v177
    %v184 = vadd.f32 %v180, %v178
    %v185 = vadd.f32 %v181, %v177
    %v186 = vadd.f32 %v182, %v178
    %v187 = vround.ne.pseudo %v183
    %v188 = vround.ne.pseudo %v184
    %v189 = vround.ne.pseudo %v185
    %v190 = vround.ne.pseudo %v186
    %v191 = vmax.f32 %v187, 0.0
    %v192 = vmax.f32 %v188, 0.0
    %v193 = vmax.f32 %v189, 0.0
    %v194 = vmax.f32 %v190, 0.0
    %v195 = vmin.f32 %v191, 255.0
    %v196 = vmin.f32 %v192, 255.0
    %v197 = vmin.f32 %v193, 255.0
    %v198 = vmin.f32 %v194, 255.0
    %v199 = vsub.f32 %v195, %v177
    %v200 = vsub.f32 %v196, %v178
    %v201 = vsub.f32 %v197, %v177
    %v202 = vsub.f32 %v198, %v178
    %v203 = vmul.f32 %v199, %v172
    %v204 = vmul.f32 %v200, %v173
    %v205 = vmul.f32 %v201, %v172
    %v206 = vmul.f32 %v202, %v173
    %207 = vst [vmem:[#allocation7] sm:$0xff] %v203
    %208 = vst [vmem:[#allocation7 + $0x8] sm:$0xff] %v204
    %209 = vst [vmem:[#allocation7 + $0x10] sm:$0xff] %v205
    %210 = vst [vmem:[#allocation7 + $0x18] sm:$0xff] %v206
    %v211 = vld [vmem:[#allocation5] sm:$0xff]
    %v212 = vld [vmem:[#allocation5 + $0x8] sm:$0xff]
    %v213 = vld [vmem:[#allocation5 + $0x10] sm:$0xff]
    %v214 = vld [vmem:[#allocation5 + $0x18] sm:$0xff]
    %v215 = vmin.f32 %v211, %v213
    %v216 = vrot.slane %v215, 4
    %v217 = vmin.f32 %v215, %v216
    %v218 = vrot.slane %v217, 2
    %v219 = vmin.f32 %v217, %v218
    %v220 = vrot.slane %v219, 1
    %v221 = vmin.f32 %v219, %v220
    %v222 = vmin.f32 %v212, %v214
    %v223 = vrot.slane %v222, 4
    %v224 = vmin.f32 %v222, %v223
    %v225 = vrot.slane %v224, 2
    %v226 = vmin.f32 %v224, %v225
    %v227 = vrot.slane %v226, 1
    %v228 = vmin.f32 %v226, %v227
    %v229 = vmax.f32 %v211, %v213
    %v230 = vrot.slane %v229, 4
    %v231 = vmax.f32 %v229, %v230
    %v232 = vrot.slane %v231, 2
    %v233 = vmax.f32 %v231, %v232
    %v234 = vrot.slane %v233, 1
    %v235 = vmax.f32 %v233, %v234
    %v236 = vmax.f32 %v212, %v214
    %v237 = vrot.slane %v236, 4
    %v238 = vmax.f32 %v236, %v237
    %v239 = vrot.slane %v238, 2
    %v240 = vmax.f32 %v238, %v239
    %v241 = vrot.slane %v240, 1
    %v242 = vmax.f32 %v240, %v241
    %v243 = vsel %vm86, %v221, inf
    %v244 = vsel %vm87, %v228, inf
    %v245 = vmin.f32 %v243, %v244
    %246 = vmin.xlane.f32.xlu0 %v245
    %v247 = vpop.xlane.xlu0 %246
    %v248 = vsel %vm86, %v235, -inf
    %v249 = vsel %vm87, %v242, -inf
    %v250 = vmax.f32 %v248, %v249
    %251 = vmax.xlane.f32.xlu0 %v250
    %v252 = vpop.xlane.xlu0 %251
    %vm253 = vcmp.eq.f32.partialorder %v252, %v247
    %v254 = vadd.f32 %v247, 1e-05
    %v255 = vsel %vm253, %v254, %v252
    %v256 = vsub.f32 %v255, %v247
    %v257 = vmul.f32 %v256, %v108
    %v258 = vrcp.pop %v257
    %v259 = vmul.f32 %v257, %v258
    %v260 = vsub.f32 1.0, %v259
    %v261 = vmul.f32 %v258, %v260
    %v262 = vadd.f32 %v258, %v261
    %vm263 = vweird.f32 %v257
    %vm264 = vweird.f32 %v258
    %vm265 = vmor %vm263, %vm264
    %v266 = vsel %vm265, %v258, %v262
    %v267 = vand.u32 2147483647, %v257
    %vm268 = vcmp.eq.f32.partialorder %v267, 8.507059e+37
    %v269 = vand.u32 %v257, 2147483648
    %v270 = vor.u32 1.1754944e-38, %v269
    %v271 = vsel %vm268, %v270, %v266
    %v272 = vmul.f32 %v247, %v271
    %v273 = vround.ne.pseudo %v272
    %v274 = vsub.f32 0.0, %v273
    %v275 = vsel %vm86, %v257, 0.0
    %v276 = vsel %vm87, %v257, 0.0
    %v277 = vmul.f32 1.0, %v271
    %v278 = vsel %vm86, %v277, 0.0
    %v279 = vsel %vm87, %v277, 0.0
    %v280 = vsel %vm86, %v274, 0.0
    %v281 = vsel %vm87, %v274, 0.0
    %v282 = vsel %vm138, %v221, inf
    %v283 = vsel %vm139, %v228, inf
    %v284 = vmin.f32 %v282, %v283
    %285 = vmin.xlane.f32.xlu0 %v284
    %v286 = vpop.xlane.xlu0 %285
    %v287 = vsel %vm138, %v235, -inf
    %v288 = vsel %vm139, %v242, -inf
    %v289 = vmax.f32 %v287, %v288
    %290 = vmax.xlane.f32.xlu0 %v289
    %v291 = vpop.xlane.xlu0 %290
    %vm292 = vcmp.eq.f32.partialorder %v291, %v286
    %v293 = vadd.f32 %v286, 1e-05
    %v294 = vsel %vm292, %v293, %v291
    %v295 = vsub.f32 %v294, %v286
    %v296 = vmul.f32 %v295, %v108
    %v297 = vrcp.pop %v296
    %v298 = vmul.f32 %v296, %v297
    %v299 = vsub.f32 1.0, %v298
    %v300 = vmul.f32 %v297, %v299
    %v301 = vadd.f32 %v297, %v300
    %vm302 = vweird.f32 %v296
    %vm303 = vweird.f32 %v297
    %vm304 = vmor %vm302, %vm303
    %v305 = vsel %vm304, %v297, %v301
    %v306 = vand.u32 2147483647, %v296
    %vm307 = vcmp.eq.f32.partialorder %v306, 8.507059e+37
    %v308 = vand.u32 %v296, 2147483648
    %v309 = vor.u32 1.1754944e-38, %v308
    %v310 = vsel %vm307, %v309, %v305
    %v311 = vmul.f32 %v286, %v310
    %v312 = vround.ne.pseudo %v311
    %v313 = vsub.f32 0.0, %v312
    %v314 = vsel %vm138, %v296, %v275
    %v315 = vsel %vm139, %v296, %v276
    %v316 = vmul.f32 1.0, %v310
    %v317 = vsel %vm138, %v316, %v278
    %v318 = vsel %vm139, %v316, %v279
    %v319 = vsel %vm138, %v313, %v280
    %v320 = vsel %vm139, %v313, %v281
    %v321 = vmul.f32 %v211, %v317
    %v322 = vmul.f32 %v212, %v318
    %v323 = vmul.f32 %v213, %v317
    %v324 = vmul.f32 %v214, %v318
    %v325 = vadd.f32 %v321, %v319
    %v326 = vadd.f32 %v322, %v320
    %v327 = vadd.f32 %v323, %v319
    %v328 = vadd.f32 %v324, %v320
    %v329 = vround.ne.pseudo %v325
    %v330 = vround.ne.pseudo %v326
    %v331 = vround.ne.pseudo %v327
    %v332 = vround.ne.pseudo %v328
    %v333 = vmax.f32 %v329, 0.0
    %v334 = vmax.f32 %v330, 0.0
    %v335 = vmax.f32 %v331, 0.0
    %v336 = vmax.f32 %v332, 0.0
    %v337 = vmin.f32 %v333, 255.0
    %v338 = vmin.f32 %v334, 255.0
    %v339 = vmin.f32 %v335, 255.0
    %v340 = vmin.f32 %v336, 255.0
    %v341 = vsub.f32 %v337, %v319
    %v342 = vsub.f32 %v338, %v320
    %v343 = vsub.f32 %v339, %v319
    %v344 = vsub.f32 %v340, %v320
    %v345 = vmul.f32 %v341, %v314
    %v346 = vmul.f32 %v342, %v315
    %v347 = vmul.f32 %v343, %v314
    %v348 = vmul.f32 %v344, %v315
    %349 = vst [vmem:[#allocation8] sm:$0xff] %v345
    %350 = vst [vmem:[#allocation8 + $0x8] sm:$0xff] %v346
    %351 = vst [vmem:[#allocation8 + $0x10] sm:$0xff] %v347
    %352 = vst [vmem:[#allocation8 + $0x18] sm:$0xff] %v348
    // Predicated region
    $region18: #{forward.1} parent=1 // pred_check
      _
    $region19: #{forward.1} parent=1 // pred_check_branch
      %354 = sbr.rel (0) target = $region21
    $region20: #{forward.1} parent=1 // pred_region
      %356 = vsyncadd [#allocation4], 0
      %s357 = sshll.u32 [#allocation7], 4
      %s358 = int_to_ptr.vmem [resolvable:$true] %s357
      %s359 = sshll.u32 %s2, 4
      %s360 = int_to_ptr.hbm [resolvable:$true] %s359
      %365 = dma.vmem_to_hbm [thread:$0]  %s358, 512, %s360, [#allocation4], 256, 256, 16
    $region21: #{forward.1} parent=1 // pred_fallthru
      _
    // Predicated region
    $region22: #{forward.1} parent=1 // pred_check
      _
    $region23: #{forward.1} parent=1 // pred_check_branch
      %367 = sbr.rel (0) target = $region25
    $region24: #{forward.1} parent=1 // pred_region
      %369 = vsyncadd [#allocation9], 0
      %s370 = sshll.u32 [#allocation8], 4
      %s371 = int_to_ptr.vmem [resolvable:$true] %s370
      %s372 = sshll.u32 %s3, 4
      %s373 = int_to_ptr.hbm [resolvable:$true] %s372
      %378 = dma.vmem_to_hbm [thread:$0]  %s371, 512, %s373, [#allocation9], 256, 256, 16
    $region25: #{forward.1} parent=1 // pred_fallthru
      _
    // Predicated region
    $region26: #{forward.1} parent=1 // pred_check
      _
    $region27: #{forward.1} parent=1 // pred_check_branch
      %380 = sbr.rel (0) target = $region29
    $region28: #{forward.1} parent=1 // pred_region
      %382 = dma.done [#allocation4], 512
    $region29: #{forward.1} parent=1 // pred_fallthru
      _
    // Predicated region
    $region30: #{forward.1} parent=1 // pred_check
      _
    $region31: #{forward.1} parent=1 // pred_check_branch
      %384 = sbr.rel (0) target = $region33
    $region32: #{forward.1} parent=1 // pred_region
      %386 = dma.done [#allocation9], 512
    $region33: #{forward.1} parent=1 // pred_fallthru
      _
    %387 = vsyncpa [#allocation3], 1
    %388 = vsyncpa [#allocation6], 1
    %389 = vsyncpa [#allocation4], 1
    %390 = vsyncpa [#allocation9], 1

</llo_original>
